<compile_context>
chip_gen: v7x
topology: tpu7x:2x2x1
jax: 0.10.0
libtpu: 0.0.40
codegen_flags: <defaults>
</compile_context>

<pallas_src>
import jax
import jax.numpy as jnp
from jax.experimental import pallas as pl
from jax.experimental.pallas import tpu as pltpu

# ---------------- synthetic "config" (deterministic, in-script) -------------
SAMPLE_RATE = 16000
NUM_FREQ = 64          # linear spectrogram frequency bins
N_MELS = 32
PRIOR_FREQ = 2000
PRIOR_WEIGHT = 0.5
GATE_COEFFICIENT = 1.0

# n_priority_freq = int(prior_freq / (sample_rate * 0.5) * linear_dim)
N_PRIORITY_FREQ = int(PRIOR_FREQ / (SAMPLE_RATE * 0.5) * NUM_FREQ)   # = 16

LANES = 128
SUBLANES = 8
LIN_TILE_TARGET_ROWS = 512   # rows (of 128 lanes) per grid step for the linear stream


def _round_up(x, m):
    return ((x + m - 1) // m) * m


# ------------------------------- kernel -------------------------------------
def _make_kernel(lin_tile, n_gate_valid):
    def kernel(mel_out_ref, mel_ref, lin_out_ref, lin_ref,
               gate_out_ref, gate_ref, out_ref):
        p = pl.program_id(0)          # parallel (megacore) axis
        i = pl.program_id(1)          # reduction axis over row tiles
        nk = pl.num_programs(1)

        # Zero the per-core accumulator block at the start of each reduction.
        @pl.when(i == 0)
        def _init():
            out_ref[...] = jnp.zeros_like(out_ref)

        # ---- mel squared error (cast to f32 AFTER the load) ----------------
        dm = mel_out_ref[...].astype(jnp.float32) - mel_ref[...].astype(jnp.float32)
        sq_m = dm * dm
        out_ref[0, 0, :, :] += jnp.sum(sq_m.reshape(-1, SUBLANES, LANES), axis=0)

        # ---- linear squared error (full + priority-masked, dl*dl reused) ---
        dl = lin_out_ref[...].astype(jnp.float32) - lin_ref[...].astype(jnp.float32)
        sq_l = dl * dl
        out_ref[0, 1, :, :] += jnp.sum(sq_l.reshape(-1, SUBLANES, LANES), axis=0)

        lane = jax.lax.broadcasted_iota(jnp.int32, sq_l.shape, 1)
        if LANES % NUM_FREQ == 0:
            # Row offsets are multiples of NUM_FREQ -> freq index is lane-only.
            freq = lane % NUM_FREQ
        else:
            row = jax.lax.broadcasted_iota(jnp.int32, sq_l.shape, 0)
            g_row = (p * nk + i) * lin_tile + row
            freq = (g_row * LANES + lane) % NUM_FREQ
        sq_p = jnp.where(freq < N_PRIORITY_FREQ, sq_l, 0.0)
        out_ref[0, 2, :, :] += jnp.sum(sq_p.reshape(-1, SUBLANES, LANES), axis=0)

        # ---- gate BCE-with-logits: tiny, computed once (p==0, last step) ----
        @pl.when(jnp.logical_and(i == nk - 1, p == 0))
        def _gate():
            x = gate_out_ref[...].astype(jnp.float32)
            z = gate_ref[...].astype(jnp.float32)
            # stable: max(x,0) - x*z + log(1 + exp(-|x|))
            bce = jnp.maximum(x, 0.0) - x * z + jnp.log1p(jnp.exp(-jnp.abs(x)))
            grow = jax.lax.broadcasted_iota(jnp.int32, x.shape, 0)
            glane = jax.lax.broadcasted_iota(jnp.int32, x.shape, 1)
            valid = (grow * LANES + glane) < n_gate_valid
            bce = jnp.where(valid, bce, 0.0)
            out_ref[0, 3, :, :] = jnp.sum(bce.reshape(-1, SUBLANES, LANES), axis=0)

    return kernel


def _slab(x, rows):
    """Flatten to 1-D, zero-pad, reshape to a lane-dense [rows, 128] slab."""
    flat = x.reshape(-1)
    pad = rows * LANES - flat.shape[0]
    if pad:
        flat = jnp.concatenate([flat, jnp.zeros((pad,), flat.dtype)])
    return flat.reshape(rows, LANES)


def _loss_sums(mel_out, mel, lin_out, lin, gate_out, gate):
    n_mel = mel.size
    n_lin = lin.size
    n_gate = gate.size

    # Tile sizing: split work 2 ways (megacore) then tile rows of the linear
    # stream at ~LIN_TILE_TARGET_ROWS; mel gets a matching number of steps.
    lin_rows = pl.cdiv(n_lin, LANES)
    grid_k = max(1, pl.cdiv(lin_rows, 2 * LIN_TILE_TARGET_ROWS))
    lin_tile = _round_up(pl.cdiv(lin_rows, 2 * grid_k), SUBLANES)
    mel_rows = pl.cdiv(n_mel, LANES)
    mel_tile = _round_up(pl.cdiv(mel_rows, 2 * grid_k), SUBLANES)
    gate_rows = _round_up(pl.cdiv(n_gate, LANES), SUBLANES)

    mel_out_s = _slab(mel_out, 2 * grid_k * mel_tile)
    mel_s = _slab(mel, 2 * grid_k * mel_tile)
    lin_out_s = _slab(lin_out, 2 * grid_k * lin_tile)
    lin_s = _slab(lin, 2 * grid_k * lin_tile)
    gate_out_s = _slab(gate_out, gate_rows)
    gate_s = _slab(gate, gate_rows)

    row_map = lambda p, i, gk=grid_k: (p * gk + i, 0)
    gate_map = lambda p, i: (0, 0)   # single resident block, fetched once

    partials = pl.pallas_call(
        _make_kernel(lin_tile, n_gate),
        out_shape=jax.ShapeDtypeStruct((2, 4, SUBLANES, LANES), jnp.float32),
        grid_spec=pltpu.PrefetchScalarGridSpec(
            num_scalar_prefetch=0,
            grid=(2, grid_k),
            in_specs=[
                pl.BlockSpec((mel_tile, LANES), row_map),
                pl.BlockSpec((mel_tile, LANES), row_map),
                pl.BlockSpec((lin_tile, LANES), row_map),
                pl.BlockSpec((lin_tile, LANES), row_map),
                pl.BlockSpec((gate_rows, LANES), gate_map),
                pl.BlockSpec((gate_rows, LANES), gate_map),
            ],
            out_specs=pl.BlockSpec((1, 4, SUBLANES, LANES),
                                   lambda p, i: (p, 0, 0, 0)),
        ),
        compiler_params=pltpu.CompilerParams(
            dimension_semantics=("parallel", "arbitrary")),
    )(mel_out_s, mel_s, lin_out_s, lin_s, gate_out_s, gate_s)

    # Tiny (2,4,8,128) epilogue reduce in plain JAX (also merges the 2 cores).
    return jnp.sum(partials, axis=(0, 2, 3))   # -> (4,)


def tacotron_loss(model_output, targets):
    """model_output / targets: tuples of (mel [B,T,M], linear [B,T,F], gate [B,T]).

    Tensors are passed in their native dtype (f32 or bf16); all accumulation
    is done in f32 inside the kernel.
    """
    mel_out, lin_out, gate_out = model_output
    mel, lin, gate = targets

    sums = _loss_sums(mel_out, mel, lin_out, lin, gate_out, gate)

    n_mel = float(mel.size)
    n_lin = float(lin.size)
    n_prio = float(lin.shape[0] * lin.shape[1] * N_PRIORITY_FREQ)
    n_gate = float(gate.size)

    mel_loss = sums[0] / n_mel
    linear_loss = ((1.0 - PRIOR_WEIGHT) * (sums[1] / n_lin)
                   + PRIOR_WEIGHT * (sums[2] / n_prio))
    gate_loss = GATE_COEFFICIENT * (sums[3] / n_gate)
    loss = mel_loss + linear_loss + gate_loss
    return [loss, mel_loss, linear_loss, gate_loss]


# ------------------------------- reference ----------------------------------
def tacotron_loss_ref(model_output, targets):
    mel_out, lin_out, gate_out = model_output
    mel, lin, gate = targets
    mse = lambda a, b: jnp.mean((a - b) ** 2)
    mel_loss = mse(mel_out, mel)
    linear_loss = ((1.0 - PRIOR_WEIGHT) * mse(lin_out, lin)
                   + PRIOR_WEIGHT * mse(lin_out[:, :, :N_PRIORITY_FREQ],
                                        lin[:, :, :N_PRIORITY_FREQ]))
    x, z = gate_out, gate
    bce = jnp.mean(jnp.maximum(x, 0.0) - x * z + jnp.log1p(jnp.exp(-jnp.abs(x))))
    gate_loss = GATE_COEFFICIENT * bce
    loss = mel_loss + linear_loss + gate_loss
    return [loss, mel_loss, linear_loss, gate_loss]


# --------------------------------- main --------------------------------------
if __name__ == "__main__":
    B, T = 2, 8
    key = jax.random.PRNGKey(0)
    k = jax.random.split(key, 6)

    mel_out = jax.random.normal(k[0], (B, T, N_MELS), jnp.float32)
    mel = jax.random.normal(k[1], (B, T, N_MELS), jnp.float32)
    lin_out = jax.random.normal(k[2], (B, T, NUM_FREQ), jnp.float32)
    lin = jax.random.normal(k[3], (B, T, NUM_FREQ), jnp.float32)
    gate_out = jax.random.normal(k[4], (B, T), jnp.float32)
    gate = jax.random.bernoulli(k[5], 0.5, (B, T)).astype(jnp.float32)

    model_output = (mel_out, lin_out, gate_out)
    targets = (mel, lin, gate)

    losses = tacotron_loss(model_output, targets)
    losses = [jax.block_until_ready(x) for x in losses]

    ref = tacotron_loss_ref(model_output, targets)
    for got, want in zip(losses, ref):
        assert jnp.allclose(got, want, rtol=1e-5, atol=1e-5), (got, want)

    print("KERNEL_OK")
</pallas_src>

<mosaic_0001>
module attributes {stable_mosaic.version = 11 : i64} {
  func.func @kernel(%arg0: i32, %arg1: i32, %arg2: memref<8x128xf32, #tpu.memory_space<vmem>>, %arg3: memref<8x128xf32, #tpu.memory_space<vmem>>, %arg4: memref<8x128xf32, #tpu.memory_space<vmem>>, %arg5: memref<8x128xf32, #tpu.memory_space<vmem>>, %arg6: memref<8x128xf32, #tpu.memory_space<vmem>>, %arg7: memref<8x128xf32, #tpu.memory_space<vmem>>, %arg8: memref<1x4x8x128xf32, #tpu.memory_space<vmem>>) attributes {dimension_semantics = [#tpu.dimension_semantics<parallel>, #tpu.dimension_semantics<arbitrary>], iteration_bounds = array<i64: 2, 1>, scalar_prefetch = 0 : i64, scratch_operands = 0 : i64, tpu.core_type = #tpu.core_type<tc>, window_params = [{transform_indices = @transform_0, window_bounds = array<i64: 8, 128>}, {transform_indices = @transform_1, window_bounds = array<i64: 8, 128>}, {transform_indices = @transform_2, window_bounds = array<i64: 8, 128>}, {transform_indices = @transform_3, window_bounds = array<i64: 8, 128>}, {pipeline_mode = #tpu.pipeline_mode<synchronous>, transform_indices = @transform_4, window_bounds = array<i64: 8, 128>}, {pipeline_mode = #tpu.pipeline_mode<synchronous>, transform_indices = @transform_5, window_bounds = array<i64: 8, 128>}, {transform_indices = @transform_6, window_bounds = array<i64: 1, 4, 8, 128>}]} {
    %c0_i32 = arith.constant 0 : i32
    %0 = arith.cmpi eq, %arg1, %c0_i32 : i32
    %1 = arith.extui %0 : i1 to i32
    %c0_i32_0 = arith.constant 0 : i32
    %2 = arith.cmpi ne, %1, %c0_i32_0 : i32
    scf.if %2 {
      %cst_40 = arith.constant 0.000000e+00 : f32
      %61 = vector.broadcast %cst_40 : f32 to vector<1x4x8x128xf32>
      %c0_41 = arith.constant 0 : index
      %c0_42 = arith.constant 0 : index
      %c0_43 = arith.constant 0 : index
      %c0_44 = arith.constant 0 : index
      %62 = vector.load %arg8[%c0_41, %c0_42, %c0_43, %c0_44] : memref<1x4x8x128xf32, #tpu.memory_space<vmem>>, vector<1x4x8x128xf32>
      tpu.vector_store %arg8[%c0_41, %c0_42, %c0_43, %c0_44], %61 {strides = array<i32>} : memref<1x4x8x128xf32, #tpu.memory_space<vmem>>, vector<1x4x8x128xf32>,
    } else {
    }
    %c0 = arith.constant 0 : index
    %c0_1 = arith.constant 0 : index
    %3 = vector.load %arg2[%c0, %c0_1] : memref<8x128xf32, #tpu.memory_space<vmem>>, vector<8x128xf32>
    %c0_2 = arith.constant 0 : index
    %c0_3 = arith.constant 0 : index
    %4 = vector.load %arg3[%c0_2, %c0_3] : memref<8x128xf32, #tpu.memory_space<vmem>>, vector<8x128xf32>
    %5 = arith.subf %3, %4 : vector<8x128xf32>
    %6 = arith.mulf %5, %5 : vector<8x128xf32>
    %c0_4 = arith.constant 0 : index
    %c0_5 = arith.constant 0 : index
    %c0_6 = arith.constant 0 : index
    %c0_7 = arith.constant 0 : index
    %7 = vector.load %arg8[%c0_4, %c0_5, %c0_6, %c0_7] : memref<1x4x8x128xf32, #tpu.memory_space<vmem>>, vector<1x1x8x128xf32>
    %8 = vector.shape_cast %7 : vector<1x1x8x128xf32> to vector<8x128xf32>
    %9 = vector.shape_cast %6 : vector<8x128xf32> to vector<1x8x128xf32>
    %cst = arith.constant dense<0.000000e+00> : vector<8x128xf32>
    %10 = vector.multi_reduction <add>, %9, %cst [0] : vector<1x8x128xf32> to vector<8x128xf32>
    %11 = arith.addf %8, %10 : vector<8x128xf32>
    %c0_8 = arith.constant 0 : index
    %c0_9 = arith.constant 0 : index
    %c0_10 = arith.constant 0 : index
    %c0_11 = arith.constant 0 : index
    %12 = vector.load %arg8[%c0_8, %c0_9, %c0_10, %c0_11] : memref<1x4x8x128xf32, #tpu.memory_space<vmem>>, vector<1x1x8x128xf32>
    %13 = vector.shape_cast %12 : vector<1x1x8x128xf32> to vector<8x128xf32>
    %14 = vector.shape_cast %11 : vector<8x128xf32> to vector<1x1x8x128xf32>
    tpu.vector_store %arg8[%c0_8, %c0_9, %c0_10, %c0_11], %14 {strides = array<i32>} : memref<1x4x8x128xf32, #tpu.memory_space<vmem>>, vector<1x1x8x128xf32>,
    %c0_12 = arith.constant 0 : index
    %c0_13 = arith.constant 0 : index
    %15 = vector.load %arg4[%c0_12, %c0_13] : memref<8x128xf32, #tpu.memory_space<vmem>>, vector<8x128xf32>
    %c0_14 = arith.constant 0 : index
    %c0_15 = arith.constant 0 : index
    %16 = vector.load %arg5[%c0_14, %c0_15] : memref<8x128xf32, #tpu.memory_space<vmem>>, vector<8x128xf32>
    %17 = arith.subf %15, %16 : vector<8x128xf32>
    %18 = arith.mulf %17, %17 : vector<8x128xf32>
    %c0_16 = arith.constant 0 : index
    %c1 = arith.constant 1 : index
    %c0_17 = arith.constant 0 : index
    %c0_18 = arith.constant 0 : index
    %19 = vector.load %arg8[%c0_16, %c1, %c0_17, %c0_18] : memref<1x4x8x128xf32, #tpu.memory_space<vmem>>, vector<1x1x8x128xf32>
    %20 = vector.shape_cast %19 : vector<1x1x8x128xf32> to vector<8x128xf32>
    %21 = vector.shape_cast %18 : vector<8x128xf32> to vector<1x8x128xf32>
    %cst_19 = arith.constant dense<0.000000e+00> : vector<8x128xf32>
    %22 = vector.multi_reduction <add>, %21, %cst_19 [0] : vector<1x8x128xf32> to vector<8x128xf32>
    %23 = arith.addf %20, %22 : vector<8x128xf32>
    %c0_20 = arith.constant 0 : index
    %c1_21 = arith.constant 1 : index
    %c0_22 = arith.constant 0 : index
    %c0_23 = arith.constant 0 : index
    %24 = vector.load %arg8[%c0_20, %c1_21, %c0_22, %c0_23] : memref<1x4x8x128xf32, #tpu.memory_space<vmem>>, vector<1x1x8x128xf32>
    %25 = vector.shape_cast %24 : vector<1x1x8x128xf32> to vector<8x128xf32>
    %26 = vector.shape_cast %23 : vector<8x128xf32> to vector<1x1x8x128xf32>
    tpu.vector_store %arg8[%c0_20, %c1_21, %c0_22, %c0_23], %26 {strides = array<i32>} : memref<1x4x8x128xf32, #tpu.memory_space<vmem>>, vector<1x1x8x128xf32>,
    %27 = tpu.iota {dimensions = array<i32: 1>} : vector<8x128xi32>
    %c64_i32 = arith.constant 64 : i32
    %c0_i32_24 = arith.constant 0 : i32
    %28 = arith.cmpi eq, %c64_i32, %c0_i32_24 : i32
    %c1_i32 = arith.constant 1 : i32
    %29 = arith.select %28, %c1_i32, %c64_i32 : i32
    %30 = vector.broadcast %29 : i32 to vector<8x128xi32>
    %31 = arith.remsi %27, %30 : vector<8x128xi32>
    %c0_i32_25 = arith.constant 0 : i32
    %32 = vector.broadcast %c0_i32_25 : i32 to vector<8x128xi32>
    %33 = arith.cmpi ne, %31, %32 : vector<8x128xi32>
    %c0_i32_26 = arith.constant 0 : i32
    %34 = vector.broadcast %c0_i32_26 : i32 to vector<8x128xi32>
    %35 = arith.cmpi slt, %31, %34 : vector<8x128xi32>
    %c0_i32_27 = arith.constant 0 : i32
    %36 = arith.cmpi slt, %29, %c0_i32_27 : i32
    %37 = vector.broadcast %36 : i1 to vector<8x128xi1>
    %38 = vector.broadcast %37 : vector<8x128xi1> to vector<8x128xi1>
    %39 = arith.xori %35, %38 : vector<8x128xi1>
    %40 = arith.andi %39, %33 : vector<8x128xi1>
    %41 = vector.broadcast %29 : i32 to vector<8x128xi32>
    %42 = arith.addi %31, %41 : vector<8x128xi32>
    %43 = arith.select %40, %42, %31 : vector<8x128xi1>, vector<8x128xi32>
    %c16_i32 = arith.constant 16 : i32
    %44 = vector.broadcast %c16_i32 : i32 to vector<8x128xi32>
    %45 = arith.cmpi slt, %43, %44 : vector<8x128xi32>
    %cst_28 = arith.constant 0.000000e+00 : f32
    %46 = vector.broadcast %cst_28 : f32 to vector<8x128xf32>
    %47 = arith.select %45, %18, %46 : vector<8x128xi1>, vector<8x128xf32>
    %c0_29 = arith.constant 0 : index
    %c2 = arith.constant 2 : index
    %c0_30 = arith.constant 0 : index
    %c0_31 = arith.constant 0 : index
    %48 = vector.load %arg8[%c0_29, %c2, %c0_30, %c0_31] : memref<1x4x8x128xf32, #tpu.memory_space<vmem>>, vector<1x1x8x128xf32>
    %49 = vector.shape_cast %48 : vector<1x1x8x128xf32> to vector<8x128xf32>
    %50 = vector.shape_cast %47 : vector<8x128xf32> to vector<1x8x128xf32>
    %cst_32 = arith.constant dense<0.000000e+00> : vector<8x128xf32>
    %51 = vector.multi_reduction <add>, %50, %cst_32 [0] : vector<1x8x128xf32> to vector<8x128xf32>
    %52 = arith.addf %49, %51 : vector<8x128xf32>
    %c0_33 = arith.constant 0 : index
    %c2_34 = arith.constant 2 : index
    %c0_35 = arith.constant 0 : index
    %c0_36 = arith.constant 0 : index
    %53 = vector.load %arg8[%c0_33, %c2_34, %c0_35, %c0_36] : memref<1x4x8x128xf32, #tpu.memory_space<vmem>>, vector<1x1x8x128xf32>
    %54 = vector.shape_cast %53 : vector<1x1x8x128xf32> to vector<8x128xf32>
    %55 = vector.shape_cast %52 : vector<8x128xf32> to vector<1x1x8x128xf32>
    tpu.vector_store %arg8[%c0_33, %c2_34, %c0_35, %c0_36], %55 {strides = array<i32>} : memref<1x4x8x128xf32, #tpu.memory_space<vmem>>, vector<1x1x8x128xf32>,
    %c0_i32_37 = arith.constant 0 : i32
    %56 = arith.cmpi eq, %arg1, %c0_i32_37 : i32
    %c0_i32_38 = arith.constant 0 : i32
    %57 = arith.cmpi eq, %arg0, %c0_i32_38 : i32
    %58 = arith.andi %56, %57 : i1
    %59 = arith.extui %58 : i1 to i32
    %c0_i32_39 = arith.constant 0 : i32
    %60 = arith.cmpi ne, %59, %c0_i32_39 : i32
    scf.if %60 {
      %c0_40 = arith.constant 0 : index
      %c0_41 = arith.constant 0 : index
      %61 = vector.load %arg6[%c0_40, %c0_41] : memref<8x128xf32, #tpu.memory_space<vmem>>, vector<8x128xf32>
      %c0_42 = arith.constant 0 : index
      %c0_43 = arith.constant 0 : index
      %62 = vector.load %arg7[%c0_42, %c0_43] : memref<8x128xf32, #tpu.memory_space<vmem>>, vector<8x128xf32>
      %cst_44 = arith.constant 0.000000e+00 : f32
      %63 = vector.broadcast %cst_44 : f32 to vector<8x128xf32>
      %64 = arith.maximumf %61, %63 : vector<8x128xf32>
      %65 = arith.mulf %61, %62 : vector<8x128xf32>
      %66 = arith.subf %64, %65 : vector<8x128xf32>
      %67 = math.absf %61 : vector<8x128xf32>
      %cst_45 = arith.constant 0.000000e+00 : f32
      %68 = vector.broadcast %cst_45 : f32 to vector<8x128xf32>
      %69 = arith.subf %68, %67 : vector<8x128xf32>
      %70 = math.exp %69 : vector<8x128xf32>
      %71 = math.log1p %70 : vector<8x128xf32>
      %72 = arith.addf %66, %71 : vector<8x128xf32>
      %73 = tpu.iota {dimensions = array<i32: 0>} : vector<8x128xi32>
      %74 = tpu.iota {dimensions = array<i32: 1>} : vector<8x128xi32>
      %c128_i32 = arith.constant 128 : i32
      %75 = vector.broadcast %c128_i32 : i32 to vector<8x128xi32>
      %76 = arith.muli %73, %75 : vector<8x128xi32>
      %77 = arith.addi %76, %74 : vector<8x128xi32>
      %c16_i32_46 = arith.constant 16 : i32
      %78 = vector.broadcast %c16_i32_46 : i32 to vector<8x128xi32>
      %79 = arith.cmpi slt, %77, %78 : vector<8x128xi32>
      %cst_47 = arith.constant 0.000000e+00 : f32
      %80 = vector.broadcast %cst_47 : f32 to vector<8x128xf32>
      %81 = arith.select %79, %72, %80 : vector<8x128xi1>, vector<8x128xf32>
      %82 = vector.shape_cast %81 : vector<8x128xf32> to vector<1x8x128xf32>
      %cst_48 = arith.constant dense<0.000000e+00> : vector<8x128xf32>
      %83 = vector.multi_reduction <add>, %82, %cst_48 [0] : vector<1x8x128xf32> to vector<8x128xf32>
      %c0_49 = arith.constant 0 : index
      %c3 = arith.constant 3 : index
      %c0_50 = arith.constant 0 : index
      %c0_51 = arith.constant 0 : index
      %84 = vector.load %arg8[%c0_49, %c3, %c0_50, %c0_51] : memref<1x4x8x128xf32, #tpu.memory_space<vmem>>, vector<1x1x8x128xf32>
      %85 = vector.shape_cast %84 : vector<1x1x8x128xf32> to vector<8x128xf32>
      %86 = vector.shape_cast %83 : vector<8x128xf32> to vector<1x1x8x128xf32>
      tpu.vector_store %arg8[%c0_49, %c3, %c0_50, %c0_51], %86 {strides = array<i32>} : memref<1x4x8x128xf32, #tpu.memory_space<vmem>>, vector<1x1x8x128xf32>,
    } else {
    }
    return
  }
  func.func @transform_0(%arg0: i32, %arg1: i32) -> (i32, i32) {
    %c1_i32 = arith.constant 1 : i32
    %0 = arith.muli %arg0, %c1_i32 : i32
    %1 = arith.addi %0, %arg1 : i32
    %c0_i32 = arith.constant 0 : i32
    %c0_i32_0 = arith.constant 0 : i32
    return %1, %c0_i32 : i32, i32
  }
  func.func @transform_1(%arg0: i32, %arg1: i32) -> (i32, i32) {
    %c1_i32 = arith.constant 1 : i32
    %0 = arith.muli %arg0, %c1_i32 : i32
    %1 = arith.addi %0, %arg1 : i32
    %c0_i32 = arith.constant 0 : i32
    %c0_i32_0 = arith.constant 0 : i32
    return %1, %c0_i32 : i32, i32
  }
  func.func @transform_2(%arg0: i32, %arg1: i32) -> (i32, i32) {
    %c1_i32 = arith.constant 1 : i32
    %0 = arith.muli %arg0, %c1_i32 : i32
    %1 = arith.addi %0, %arg1 : i32
    %c0_i32 = arith.constant 0 : i32
    %c0_i32_0 = arith.constant 0 : i32
    return %1, %c0_i32 : i32, i32
  }
  func.func @transform_3(%arg0: i32, %arg1: i32) -> (i32, i32) {
    %c1_i32 = arith.constant 1 : i32
    %0 = arith.muli %arg0, %c1_i32 : i32
    %1 = arith.addi %0, %arg1 : i32
    %c0_i32 = arith.constant 0 : i32
    %c0_i32_0 = arith.constant 0 : i32
    return %1, %c0_i32 : i32, i32
  }
  func.func @transform_4(%arg0: i32, %arg1: i32) -> (i32, i32) {
    %c0_i32 = arith.constant 0 : i32
    %c0_i32_0 = arith.constant 0 : i32
    %c0_i32_1 = arith.constant 0 : i32
    return %c0_i32, %c0_i32_0 : i32, i32
  }
  func.func @transform_5(%arg0: i32, %arg1: i32) -> (i32, i32) {
    %c0_i32 = arith.constant 0 : i32
    %c0_i32_0 = arith.constant 0 : i32
    %c0_i32_1 = arith.constant 0 : i32
    return %c0_i32, %c0_i32_0 : i32, i32
  }
  func.func @transform_6(%arg0: i32, %arg1: i32) -> (i32, i32, i32, i32) {
    %c0_i32 = arith.constant 0 : i32
    %c0_i32_0 = arith.constant 0 : i32
    %c0_i32_1 = arith.constant 0 : i32
    %c0_i32_2 = arith.constant 0 : i32
    return %arg0, %c0_i32, %c0_i32_0, %c0_i32_1 : i32, i32, i32, i32
  }
}

</mosaic_0001>

<llo_original>
// kernel: tpu_custom_call.1
$region0: #{tpu_custom_call.1}
  #allocation0 [shape = 'u32[]', space=smem, size = 0x4, offset = 0x4, fixed_abs, tag = 'smem constant byte address 0x4 - core index']
  #allocation1 [shape = 'u32[144,128]{1,0:T(1,128)}', space=vmem, size = 0x12000, scoped, tag = 'internal scratch']
  %s0 = inlined_call_operand.hbm [shape: f32[16,128], index: 0, kind: input, shape index: {}]
  %s1 = inlined_call_operand.hbm [shape: f32[16,128], index: 1, kind: input, shape index: {}]
  %s2 = inlined_call_operand.hbm [shape: f32[16,128], index: 2, kind: input, shape index: {}]
  %s3 = inlined_call_operand.hbm [shape: f32[16,128], index: 3, kind: input, shape index: {}]
  %s4 = inlined_call_operand.vmem [shape: f32[8,128], index: 4, kind: input, shape index: {}]
  %s5 = inlined_call_operand.vmem [shape: f32[8,128], index: 5, kind: input, shape index: {}]
  %s6 = inlined_call_operand.hbm [shape: f32[2,4,8,128], index: 6, kind: output, shape index: {}]
  %s7 = sld [smem:[#allocation0]]
  $region81: #{tpu_custom_call.1} parent=0
    _
  %s9 = ssub.s32 1, %s7
  %s10 = scalar_select 0, %s9, %s7
  $region1: #{tpu_custom_call.1} parent=0
    #allocation2 [shape = 'u8[8192]{0}', space=vmem, size = 0x2000, scoped, tag = 'input window, operand 0']
    #allocation3 [shape = 's32[2]{0}', space=sflag, size = 0x8, scoped, tag = 'scoped memory for tpu_custom_call.1']
    #allocation4 [shape = 's32[2]{0}', space=sflag, size = 0x8, scoped, tag = 'scoped memory for tpu_custom_call.1']
    #allocation5 [shape = 'u8[8192]{0}', space=vmem, size = 0x2000, scoped, tag = 'input window, operand 1']
    #allocation6 [shape = 's32[2]{0}', space=sflag, size = 0x8, scoped, tag = 'scoped memory for tpu_custom_call.1']
    #allocation7 [shape = 'u8[8192]{0}', space=vmem, size = 0x2000, scoped, tag = 'input window, operand 2']
    #allocation8 [shape = 'u8[8192]{0}', space=vmem, size = 0x2000, scoped, tag = 'input window, operand 3']
    #allocation9 [shape = 's32[2]{0}', space=sflag, size = 0x8, scoped, tag = 'scoped memory for tpu_custom_call.1']
    #allocation10 [shape = 'u8[32768]{0}', space=vmem, size = 0x8000, scoped, tag = 'output window, operand 0']
    %11 = vsyncpa [#allocation3], 0
    %s12 = scalar_lea.sflag [#allocation3], 1
    %13 = vsyncpa %s12, 0
    %14 = vsyncpa [#allocation6], 0
    %s15 = scalar_lea.sflag [#allocation6], 1
    %16 = vsyncpa %s15, 0
    %17 = vsyncpa [#allocation9], 0
    %s18 = scalar_lea.sflag [#allocation9], 1
    %19 = vsyncpa %s18, 0
    %20 = vsyncpa [#allocation4], 0
    %s21 = scalar_lea.sflag [#allocation4], 1
    %22 = vsyncpa %s21, 0
    loop: start=0, step=1, limit=4
    $region2: #{tpu_custom_call.1} parent=1 // loop_pre_header
      _
    $region3: #{tpu_custom_call.1} parent=1 // loop_header
      %s24 = sphi 0, %s28
      %p25 = scmp.ge.s32.totalorder %s24, 4
      %s31 = sphi 0, %s43
      %s32 = sphi 0, %s39
      %s33 = sphi 0, %s31
      %s34 = sphi 0, %s32
      %s35 = sphi 0, %s33
      %s36 = sphi 0, %s34
      %s48 = sphi 0, %s50
      %s51 = sphi 0, %s48
      %s52 = sphi 0, %s51
      %s68 = sphi 0, %s52
      %s76 = sphi 0, %s78
      %s79 = sphi 0, %s76
      %s80 = sphi 0, %s79
      %s96 = sphi 0, %s80
      %s104 = sphi 0, %s106
      %s107 = sphi 0, %s104
      %s108 = sphi 0, %s107
      %s124 = sphi 0, %s108
      %s132 = sphi 0, %s134
      %s135 = sphi 0, %s132
      %s136 = sphi 0, %s135
      %s152 = sphi 0, %s136
      %s156 = sphi 0, %s156
      %s158 = sphi 0, %s156
      %s159 = sphi 0, %s158
      %s173 = sphi 0, %s159
      %s177 = sphi 0, %s177
      %s179 = sphi 0, %s177
      %s180 = sphi 0, %s179
      %s194 = sphi 0, %s180
      %s200 = sphi 0, %s202
      %s203 = sphi 0, %s200
      %s204 = sphi 0, %s203
      %s220 = sphi 0, %s204
    $region4: #{tpu_custom_call.1} parent=1 // loop_header_branch
      %27 = sbr.rel (%p25) target = $region8
    $region5: #{tpu_custom_call.1} parent=1 // loop_body
      %s29 = ssub.s32 %s24, 1
      %s30 = ssub.s32 %s24, 2
      %s37 = sadd.s32 1, %s32
      %p38 = scmp.ge.s32.totalorder %s37, 1
      %s39 = scalar_select %p38, 0, %s37
      %s40 = sadd.s32 1, %s31
      %s41 = scalar_select %p38, %s40, %s31
      %p42 = scmp.ge.s32.totalorder %s41, 2
      %s43 = scalar_select %p42, 0, %s41
      %s44 = sadd.s32 %s31, %s32
      %s45 = sadd.s32 %s43, %s39
      %s46 = ssub.s32 %s44, %s45
      %p47 = scmp.eq.s32.totalorder %s46, 0
      %s49 = sadd.s32 %s48, 1
      %s50 = scalar_select %p47, %s48, %s49
      %p53 = pneg %p47
      %p54 = scmp.eq.s32.totalorder %s24, 1
      %p55 = por %p53, %p54
      %p56 = scmp.ne.s32.totalorder %s48, %s51
      %p57 = scmp.eq.s32.totalorder %s24, 0
      %p58 = por %p56, %p57
      %p59 = scmp.ne.s32.totalorder %s48, %s51
      %p60 = scmp.eq.s32.totalorder %s29, 1
      %p61 = por %p59, %p60
      %p62 = scmp.ne.s32.totalorder %s51, %s52
      %p63 = scmp.eq.s32.totalorder %s29, 0
      %p64 = por %p62, %p63
      %p65 = scmp.ne.s32.totalorder %s51, %s52
      %p66 = scmp.eq.s32.totalorder %s30, 1
      %p67 = por %p65, %p66
      %p69 = scmp.ne.s32.totalorder %s52, %s68
      %p70 = scmp.eq.s32.totalorder %s30, 0
      %p71 = por %p69, %p70
      %s72 = sadd.s32 %s31, %s32
      %s73 = sadd.s32 %s43, %s39
      %s74 = ssub.s32 %s72, %s73
      %p75 = scmp.eq.s32.totalorder %s74, 0
      %s77 = sadd.s32 %s76, 1
      %s78 = scalar_select %p75, %s76, %s77
      %p81 = pneg %p75
      %p82 = scmp.eq.s32.totalorder %s24, 1
      %p83 = por %p81, %p82
      %p84 = scmp.ne.s32.totalorder %s76, %s79
      %p85 = scmp.eq.s32.totalorder %s24, 0
      %p86 = por %p84, %p85
      %p87 = scmp.ne.s32.totalorder %s76, %s79
      %p88 = scmp.eq.s32.totalorder %s29, 1
      %p89 = por %p87, %p88
      %p90 = scmp.ne.s32.totalorder %s79, %s80
      %p91 = scmp.eq.s32.totalorder %s29, 0
      %p92 = por %p90, %p91
      %p93 = scmp.ne.s32.totalorder %s79, %s80
      %p94 = scmp.eq.s32.totalorder %s30, 1
      %p95 = por %p93, %p94
      %p97 = scmp.ne.s32.totalorder %s80, %s96
      %p98 = scmp.eq.s32.totalorder %s30, 0
      %p99 = por %p97, %p98
      %s100 = sadd.s32 %s31, %s32
      %s101 = sadd.s32 %s43, %s39
      %s102 = ssub.s32 %s100, %s101
      %p103 = scmp.eq.s32.totalorder %s102, 0
      %s105 = sadd.s32 %s104, 1
      %s106 = scalar_select %p103, %s104, %s105
      %p109 = pneg %p103
      %p110 = scmp.eq.s32.totalorder %s24, 1
      %p111 = por %p109, %p110
      %p112 = scmp.ne.s32.totalorder %s104, %s107
      %p113 = scmp.eq.s32.totalorder %s24, 0
      %p114 = por %p112, %p113
      %p115 = scmp.ne.s32.totalorder %s104, %s107
      %p116 = scmp.eq.s32.totalorder %s29, 1
      %p117 = por %p115, %p116
      %p118 = scmp.ne.s32.totalorder %s107, %s108
      %p119 = scmp.eq.s32.totalorder %s29, 0
      %p120 = por %p118, %p119
      %p121 = scmp.ne.s32.totalorder %s107, %s108
      %p122 = scmp.eq.s32.totalorder %s30, 1
      %p123 = por %p121, %p122
      %p125 = scmp.ne.s32.totalorder %s108, %s124
      %p126 = scmp.eq.s32.totalorder %s30, 0
      %p127 = por %p125, %p126
      %s128 = sadd.s32 %s31, %s32
      %s129 = sadd.s32 %s43, %s39
      %s130 = ssub.s32 %s128, %s129
      %p131 = scmp.eq.s32.totalorder %s130, 0
      %s133 = sadd.s32 %s132, 1
      %s134 = scalar_select %p131, %s132, %s133
      %p137 = pneg %p131
      %p138 = scmp.eq.s32.totalorder %s24, 1
      %p139 = por %p137, %p138
      %p140 = scmp.ne.s32.totalorder %s132, %s135
      %p141 = scmp.eq.s32.totalorder %s24, 0
      %p142 = por %p140, %p141
      %p143 = scmp.ne.s32.totalorder %s132, %s135
      %p144 = scmp.eq.s32.totalorder %s29, 1
      %p145 = por %p143, %p144
      %p146 = scmp.ne.s32.totalorder %s135, %s136
      %p147 = scmp.eq.s32.totalorder %s29, 0
      %p148 = por %p146, %p147
      %p149 = scmp.ne.s32.totalorder %s135, %s136
      %p150 = scmp.eq.s32.totalorder %s30, 1
      %p151 = por %p149, %p150
      %p153 = scmp.ne.s32.totalorder %s136, %s152
      %p154 = scmp.eq.s32.totalorder %s30, 0
      %p155 = por %p153, %p154
      %s157 = sadd.s32 %s156, 1
      %p160 = scmp.eq.s32.totalorder %s24, 1
      %p161 = scmp.ne.s32.totalorder %s156, %s158
      %p162 = scmp.eq.s32.totalorder %s24, 0
      %p163 = por %p161, %p162
      %p164 = scmp.ne.s32.totalorder %s156, %s158
      %p165 = scmp.eq.s32.totalorder %s29, 1
      %p166 = por %p164, %p165
      %p167 = scmp.ne.s32.totalorder %s158, %s159
      %p168 = scmp.eq.s32.totalorder %s29, 0
      %p169 = por %p167, %p168
      %p170 = scmp.ne.s32.totalorder %s158, %s159
      %p171 = scmp.eq.s32.totalorder %s30, 1
      %p172 = por %p170, %p171
      %p174 = scmp.ne.s32.totalorder %s159, %s173
      %p175 = scmp.eq.s32.totalorder %s30, 0
      %p176 = por %p174, %p175
      %s178 = sadd.s32 %s177, 1
      %p181 = scmp.eq.s32.totalorder %s24, 1
      %p182 = scmp.ne.s32.totalorder %s177, %s179
      %p183 = scmp.eq.s32.totalorder %s24, 0
      %p184 = por %p182, %p183
      %p185 = scmp.ne.s32.totalorder %s177, %s179
      %p186 = scmp.eq.s32.totalorder %s29, 1
      %p187 = por %p185, %p186
      %p188 = scmp.ne.s32.totalorder %s179, %s180
      %p189 = scmp.eq.s32.totalorder %s29, 0
      %p190 = por %p188, %p189
      %p191 = scmp.ne.s32.totalorder %s179, %s180
      %p192 = scmp.eq.s32.totalorder %s30, 1
      %p193 = por %p191, %p192
      %p195 = scmp.ne.s32.totalorder %s180, %s194
      %p196 = scmp.eq.s32.totalorder %s30, 0
      %p197 = por %p195, %p196
      %s198 = ssub.s32 %s31, %s43
      %p199 = scmp.eq.s32.totalorder %s198, 0
      %s201 = sadd.s32 %s200, 1
      %s202 = scalar_select %p199, %s200, %s201
      %p205 = pneg %p199
      %p206 = scmp.eq.s32.totalorder %s24, 1
      %p207 = por %p205, %p206
      %p208 = scmp.ne.s32.totalorder %s200, %s203
      %p209 = scmp.eq.s32.totalorder %s24, 0
      %p210 = por %p208, %p209
      %p211 = scmp.ne.s32.totalorder %s200, %s203
      %p212 = scmp.eq.s32.totalorder %s29, 1
      %p213 = por %p211, %p212
      %p214 = scmp.ne.s32.totalorder %s203, %s204
      %p215 = scmp.eq.s32.totalorder %s29, 0
      %p216 = por %p214, %p215
      %p217 = scmp.ne.s32.totalorder %s203, %s204
      %p218 = scmp.eq.s32.totalorder %s30, 1
      %p219 = por %p217, %p218
      %p221 = scmp.ne.s32.totalorder %s204, %s220
      %p222 = scmp.eq.s32.totalorder %s30, 0
      %p223 = por %p221, %p222
      %p224 = scmp.le.s32.totalorder 1, %s24
      %p225 = scmp.lt.s32.totalorder %s24, 3
      %p226 = pnand %p224, %p225
      %p227 = pneg %p226
      // Predicated region
      $region9: #{tpu_custom_call.1} parent=5 // pred_check
        _
      $region10: #{tpu_custom_call.1} parent=5 // pred_check_branch
        %229 = sbr.rel (%p226) target = $region12
      $region11: #{tpu_custom_call.1} parent=5 // pred_region
        %s230 = ssub.s32 %s24, 1
        // Predicated region
        $region13: #{tpu_custom_call.1} parent=11 // pred_check
          %p231 = pneg %p169
        $region14: #{tpu_custom_call.1} parent=11 // pred_check_branch
          %233 = sbr.rel (%p231) target = $region16
        $region15: #{tpu_custom_call.1} parent=11 // pred_region
          _
        $region16: #{tpu_custom_call.1} parent=11 // pred_fallthru
          _
        // Predicated region
        $region17: #{tpu_custom_call.1} parent=11 // pred_check
          %p234 = pneg %p190
        $region18: #{tpu_custom_call.1} parent=11 // pred_check_branch
          %236 = sbr.rel (%p234) target = $region20
        $region19: #{tpu_custom_call.1} parent=11 // pred_region
          _
        $region20: #{tpu_custom_call.1} parent=11 // pred_fallthru
          _
      $region12: #{tpu_custom_call.1} parent=5 // pred_fallthru
        _
      %p237 = scmp.lt.s32.totalorder %s24, 2
      // Predicated region
      $region21: #{tpu_custom_call.1} parent=5 // pred_check
        %p238 = pneg %p237
      $region22: #{tpu_custom_call.1} parent=5 // pred_check_branch
        %240 = sbr.rel (%p238) target = $region24
      $region23: #{tpu_custom_call.1} parent=5 // pred_region
        // Predicated region
        $region25: #{tpu_custom_call.1} parent=23 // pred_check
          %p241 = pneg %p58
        $region26: #{tpu_custom_call.1} parent=23 // pred_check_branch
          %243 = sbr.rel (%p241) target = $region28
        $region27: #{tpu_custom_call.1} parent=23 // pred_region
          %s244 = sand.u32 %s48, 1
          %s245 = scalar_lea.sflag [#allocation3], %s244
          %s246 = sand.u32 %s48, 1
          %s247 = smul.addr %s246, 8
          %s248 = scalar_lea.vmem [#allocation2], %s247
          %s249 = sadd.s32 %s31, %s32
          %s251 = ssub.s32 128, 128
          %252 = vsyncadd %s245, %s251
          %s253 = smul.addr %s249, 128
          %s254 = scalar_lea.hbm %s0, %s253
          %s256 = sshll.u32 %s248, 4
          %s257 = int_to_ptr.vmem [resolvable:$true] %s256
          %259 = dma.hbm_to_vmem [thread:$0]  %s254, 128, %s257, %s245
        $region28: #{tpu_custom_call.1} parent=23 // pred_fallthru
          _
        // Predicated region
        $region29: #{tpu_custom_call.1} parent=23 // pred_check
          %p260 = pneg %p86
        $region30: #{tpu_custom_call.1} parent=23 // pred_check_branch
          %262 = sbr.rel (%p260) target = $region32
        $region31: #{tpu_custom_call.1} parent=23 // pred_region
          %s263 = sand.u32 %s24, 1
          %s264 = scalar_lea.sflag [#allocation6], %s263
          %s265 = sand.u32 %s76, 1
          %s266 = smul.addr %s265, 8
          %s267 = scalar_lea.vmem [#allocation5], %s266
          %s268 = sadd.s32 %s31, %s32
          %s270 = ssub.s32 128, 128
          %271 = vsyncadd %s264, %s270
          %s272 = smul.addr %s268, 128
          %s273 = scalar_lea.hbm %s1, %s272
          %s275 = sshll.u32 %s267, 4
          %s276 = int_to_ptr.vmem [resolvable:$true] %s275
          %278 = dma.hbm_to_vmem [thread:$0]  %s273, 128, %s276, %s264
        $region32: #{tpu_custom_call.1} parent=23 // pred_fallthru
          _
        // Predicated region
        $region33: #{tpu_custom_call.1} parent=23 // pred_check
          %p279 = pneg %p114
        $region34: #{tpu_custom_call.1} parent=23 // pred_check_branch
          %281 = sbr.rel (%p279) target = $region36
        $region35: #{tpu_custom_call.1} parent=23 // pred_region
          %s282 = sand.u32 %s24, 1
          %s283 = scalar_lea.sflag [#allocation6], %s282
          %s284 = sand.u32 %s104, 1
          %s285 = smul.addr %s284, 8
          %s286 = scalar_lea.vmem [#allocation7], %s285
          %s287 = sadd.s32 %s31, %s32
          %s289 = ssub.s32 128, 128
          %290 = vsyncadd %s283, %s289
          %s291 = smul.addr %s287, 128
          %s292 = scalar_lea.hbm %s2, %s291
          %s294 = sshll.u32 %s286, 4
          %s295 = int_to_ptr.vmem [resolvable:$true] %s294
          %297 = dma.hbm_to_vmem [thread:$0]  %s292, 128, %s295, %s283
        $region36: #{tpu_custom_call.1} parent=23 // pred_fallthru
          _
        // Predicated region
        $region37: #{tpu_custom_call.1} parent=23 // pred_check
          %p298 = pneg %p142
        $region38: #{tpu_custom_call.1} parent=23 // pred_check_branch
          %300 = sbr.rel (%p298) target = $region40
        $region39: #{tpu_custom_call.1} parent=23 // pred_region
          %s301 = sand.u32 %s132, 1
          %s302 = scalar_lea.sflag [#allocation9], %s301
          %s303 = sand.u32 %s132, 1
          %s304 = smul.addr %s303, 8
          %s305 = scalar_lea.vmem [#allocation8], %s304
          %s306 = sadd.s32 %s31, %s32
          %s308 = ssub.s32 128, 128
          %309 = vsyncadd %s302, %s308
          %s310 = smul.addr %s306, 128
          %s311 = scalar_lea.hbm %s3, %s310
          %s313 = sshll.u32 %s305, 4
          %s314 = int_to_ptr.vmem [resolvable:$true] %s313
          %316 = dma.hbm_to_vmem [thread:$0]  %s311, 128, %s314, %s302
        $region40: #{tpu_custom_call.1} parent=23 // pred_fallthru
          _
      $region24: #{tpu_custom_call.1} parent=5 // pred_fallthru
        _
      %p317 = scmp.le.s32.totalorder 1, %s24
      %p318 = scmp.lt.s32.totalorder %s24, 3
      %p319 = pnand %p317, %p318
      %p320 = pneg %p319
      // Predicated region
      $region41: #{tpu_custom_call.1} parent=5 // pred_check
        _
      $region42: #{tpu_custom_call.1} parent=5 // pred_check_branch
        %322 = sbr.rel (%p319) target = $region44
      $region43: #{tpu_custom_call.1} parent=5 // pred_region
        %s323 = ssub.s32 %s24, 1
        %s324 = sand.u32 %s51, 1
        %s325 = scalar_lea.sflag [#allocation3], %s324
        %s326 = sand.u32 %s51, 1
        %s327 = smul.addr %s326, 8
        %s328 = scalar_lea.vmem [#allocation2], %s327
        // Predicated region
        $region45: #{tpu_custom_call.1} parent=43 // pred_check
          %p329 = pneg %p64
        $region46: #{tpu_custom_call.1} parent=43 // pred_check_branch
          %331 = sbr.rel (%p329) target = $region48
        $region47: #{tpu_custom_call.1} parent=43 // pred_region
          %332 = dma.done %s325, 128
        $region48: #{tpu_custom_call.1} parent=43 // pred_fallthru
          _
        %s333 = sand.u32 %s29, 1
        %s334 = scalar_lea.sflag [#allocation6], %s333
        %s335 = sand.u32 %s79, 1
        %s336 = smul.addr %s335, 8
        %s337 = scalar_lea.vmem [#allocation5], %s336
        // Predicated region
        $region49: #{tpu_custom_call.1} parent=43 // pred_check
          %p338 = pneg %p92
        $region50: #{tpu_custom_call.1} parent=43 // pred_check_branch
          %340 = sbr.rel (%p338) target = $region52
        $region51: #{tpu_custom_call.1} parent=43 // pred_region
          %341 = dma.done %s334, 128
        $region52: #{tpu_custom_call.1} parent=43 // pred_fallthru
          _
        %s342 = sand.u32 %s29, 1
        %s343 = scalar_lea.sflag [#allocation6], %s342
        %s344 = sand.u32 %s107, 1
        %s345 = smul.addr %s344, 8
        %s346 = scalar_lea.vmem [#allocation7], %s345
        // Predicated region
        $region53: #{tpu_custom_call.1} parent=43 // pred_check
          %p347 = pneg %p120
        $region54: #{tpu_custom_call.1} parent=43 // pred_check_branch
          %349 = sbr.rel (%p347) target = $region56
        $region55: #{tpu_custom_call.1} parent=43 // pred_region
          %350 = dma.done %s343, 128
        $region56: #{tpu_custom_call.1} parent=43 // pred_fallthru
          _
        %s351 = sand.u32 %s135, 1
        %s352 = scalar_lea.sflag [#allocation9], %s351
        %s353 = sand.u32 %s135, 1
        %s354 = smul.addr %s353, 8
        %s355 = scalar_lea.vmem [#allocation8], %s354
        // Predicated region
        $region57: #{tpu_custom_call.1} parent=43 // pred_check
          %p356 = pneg %p148
        $region58: #{tpu_custom_call.1} parent=43 // pred_check_branch
          %358 = sbr.rel (%p356) target = $region60
        $region59: #{tpu_custom_call.1} parent=43 // pred_region
          %359 = dma.done %s352, 128
        $region60: #{tpu_custom_call.1} parent=43 // pred_fallthru
          _
        %s360 = sand.u32 %s51, 1
        %s361 = scalar_lea.sflag [#allocation3], %s360
        %s362 = sand.u32 %s51, 1
        %s363 = smul.addr %s362, 8
        %s364 = scalar_lea.vmem [#allocation2], %s363
        %p365 = pneg %p64
        %p366 = pneg %p61
        %s367 = sand.u32 %s29, 1
        %s368 = scalar_lea.sflag [#allocation6], %s367
        %s369 = sand.u32 %s79, 1
        %s370 = smul.addr %s369, 8
        %s371 = scalar_lea.vmem [#allocation5], %s370
        %p372 = pneg %p92
        %p373 = pneg %p89
        %s374 = sand.u32 %s29, 1
        %s375 = scalar_lea.sflag [#allocation6], %s374
        %s376 = sand.u32 %s107, 1
        %s377 = smul.addr %s376, 8
        %s378 = scalar_lea.vmem [#allocation7], %s377
        %p379 = pneg %p120
        %p380 = pneg %p117
        %s381 = sand.u32 %s135, 1
        %s382 = scalar_lea.sflag [#allocation9], %s381
        %s383 = sand.u32 %s135, 1
        %s384 = smul.addr %s383, 8
        %s385 = scalar_lea.vmem [#allocation8], %s384
        %p386 = pneg %p148
        %p387 = pneg %p145
        %p388 = pneg %p169
        %p389 = pneg %p166
        %p390 = pneg %p190
        %p391 = pneg %p187
        %p392 = pneg %p216
        %p393 = pneg %p213
        %s394 = sand.u32 %s203, 1
        %s395 = scalar_lea.sflag [#allocation4], %s394
        %s396 = sand.u32 %s203, 1
        %s397 = smul.addr %s396, 32
        %s398 = scalar_lea.vmem [#allocation10], %s397
        %s399 = sadd.s32 %s33, %s34
        %s400 = sadd.s32 %s33, %s34
        %s401 = sadd.s32 %s33, %s34
        %s402 = sadd.s32 %s33, %s34
        %p403 = scmp.eq.s32.totalorder %s34, 0
        // Predicated region
        $region61: #{tpu_custom_call.1} parent=43 // pred_check
          %p404 = pneg %p403
        $region62: #{tpu_custom_call.1} parent=43 // pred_check_branch
          %406 = sbr.rel (%p404) target = $region64
        $region63: #{tpu_custom_call.1} parent=43 // pred_region
          %407 = vst [vmem:[%s398] sm:$0xff] 0.0
          %408 = vst [vmem:[%s398 + $0x8] sm:$0xff] 0.0
          %409 = vst [vmem:[%s398 + $0x10] sm:$0xff] 0.0
          %410 = vst [vmem:[%s398 + $0x18] sm:$0xff] 0.0
        $region64: #{tpu_custom_call.1} parent=43 // pred_fallthru
          _
        %v411 = vld [vmem:[%s328] sm:$0xff]
        %v412 = vld [vmem:[%s337] sm:$0xff]
        %v413 = vsub.f32 %v411, %v412
        %v414 = vmul.f32 %v413, %v413
        %v415 = vld [vmem:[%s398] sm:$0xff]
        %v416 = vadd.f32 %v414, 0.0
        %v417 = vadd.f32 %v415, %v416
        %418 = vst [vmem:[%s398] sm:$0xff] %v417
        %v419 = vld [vmem:[%s346] sm:$0xff]
        %v420 = vld [vmem:[%s355] sm:$0xff]
        %v421 = vsub.f32 %v419, %v420
        %v422 = vmul.f32 %v421, %v421
        %s423 = scalar_lea.vmem %s398, 8 [#allocation10]
        %v424 = vld [vmem:[%s423] sm:$0xff]
        %v425 = vadd.f32 %v422, 0.0
        %v426 = vadd.f32 %v424, %v425
        %427 = vst [vmem:[%s423] sm:$0xff] %v426
        %v428 = vlaneseq
        %v429 = vand.u32 %v428, 127
        %vm430 = vcmp.lt.s32.totalorder %v429, 0
        %v431 = vsub.s32 0, %v429
        %v432 = vsel %vm430, %v431, %v429
        %v433 = vshrl.u32 %v432, 6
        %v434 = vand.u32 %v432, 63
        %v435 = vsub.s32 0, %v434
        %v436 = vsel %vm430, %v435, %v434
        %vm437 = vcmp.ne.s32.totalorder %v436, 0
        %vm438 = vcmp.lt.s32.totalorder %v436, 0
        %vm439 = vmand %vm438, %vm437
        %v440 = vadd.s32 %v436, 64
        %v441 = vsel %vm439, %v440, %v436
        %vm442 = vcmp.lt.s32.totalorder %v441, 16
        %v443 = vsel %vm442, %v422, 0.0
        %s444 = scalar_lea.vmem %s398, 16 [#allocation10]
        %v445 = vld [vmem:[%s444] sm:$0xff]
        %v446 = vadd.f32 %v443, 0.0
        %v447 = vadd.f32 %v445, %v446
        %448 = vst [vmem:[%s444] sm:$0xff] %v447
        %p449 = scmp.eq.s32.totalorder %s33, 0
        %p450 = pnand %p403, %p449
        %p451 = pneg %p450
        // Predicated region
        $region65: #{tpu_custom_call.1} parent=43 // pred_check
          _
        $region66: #{tpu_custom_call.1} parent=43 // pred_check_branch
          %453 = sbr.rel (%p450) target = $region68
        $region67: #{tpu_custom_call.1} parent=43 // pred_region
          %v454 = vld [vmem:[%s4] sm:$0xff]
          %v455 = vld [vmem:[%s5] sm:$0xff]
          %v456 = vmax.f32 %v454, 0.0
          %v457 = vmul.f32 %v454, %v455
          %v458 = vsub.f32 %v456, %v457
          %v459 = vand.u32 2147483647, %v454
          %v460 = vsub.f32 0.0, %v459
          %v461 = vmul.f32 %v460, 1.442695
          %v462 = vpow.pop %v461
          %v463 = vadd.f32 %v462, 1.0
          %v464 = vlog2.pop %v463
          %v465 = vmul.f32 %v464, 0.6931472
          %v466 = vmul.f32 -0.5, %v462
          %v467 = vadd.f32 %v466, 1.0
          %v468 = vmul.f32 %v467, %v462
          %v469 = vand.u32 2147483647, %v462
          %vm470 = vcmp.lt.f32.partialorder %v469, 0.0004427343
          %v471 = vsel %vm470, %v468, %v465
          %v472 = vadd.f32 %v458, %v471
          %v473 = vlaneseq
          %v474 = vshrl.u32 %v473, 7
          %v475 = vmul.u32 %v474, 128
          %v476 = vadd.s32 %v475, %v429
          %vm477 = vcmp.lt.s32.totalorder %v476, 16
          %v478 = vsel %vm477, %v472, 0.0
          %v479 = vadd.f32 %v478, 0.0
          %s480 = scalar_lea.vmem %s398, 24 [#allocation10]
          %481 = vst [vmem:[%s480] sm:$0xff] %v479
        $region68: #{tpu_custom_call.1} parent=43 // pred_fallthru
          _
        %s482 = sand.u32 %s203, 1
        %s483 = scalar_lea.sflag [#allocation4], %s482
        %s484 = sand.u32 %s203, 1
        %s485 = smul.addr %s484, 32
        %s486 = scalar_lea.vmem [#allocation10], %s485
        // Predicated region
        $region69: #{tpu_custom_call.1} parent=43 // pred_check
          %p487 = pneg %p213
        $region70: #{tpu_custom_call.1} parent=43 // pred_check_branch
          %489 = sbr.rel (%p487) target = $region72
        $region71: #{tpu_custom_call.1} parent=43 // pred_region
          %s491 = ssub.s32 512, 512
          %492 = vsyncadd %s483, %s491
          %s493 = smul.addr %s33, 4
          %s494 = smul.addr %s493, 128
          %s495 = scalar_lea.hbm %s6, %s494
          %s496 = sshll.u32 %s486, 4
          %s497 = int_to_ptr.vmem [resolvable:$true] %s496
          %502 = dma.vmem_to_hbm [thread:$0]  %s497, 512, %s495, %s483, 128, 128, 8
        $region72: #{tpu_custom_call.1} parent=43 // pred_fallthru
          _
      $region44: #{tpu_custom_call.1} parent=5 // pred_fallthru
        _
      %p503 = scmp.le.s32.totalorder 2, %s24
      // Predicated region
      $region73: #{tpu_custom_call.1} parent=5 // pred_check
        %p504 = pneg %p503
      $region74: #{tpu_custom_call.1} parent=5 // pred_check_branch
        %506 = sbr.rel (%p504) target = $region76
      $region75: #{tpu_custom_call.1} parent=5 // pred_region
        %s507 = ssub.s32 %s24, 2
        // Predicated region
        $region77: #{tpu_custom_call.1} parent=75 // pred_check
          %p508 = pneg %p219
        $region78: #{tpu_custom_call.1} parent=75 // pred_check_branch
          %510 = sbr.rel (%p508) target = $region80
        $region79: #{tpu_custom_call.1} parent=75 // pred_region
          %s511 = sand.u32 %s204, 1
          %s512 = scalar_lea.sflag [#allocation4], %s511
          %s513 = sand.u32 %s204, 1
          %s514 = smul.addr %s513, 32
          %s515 = scalar_lea.vmem [#allocation10], %s514
          %516 = dma.done %s512, 512
        $region80: #{tpu_custom_call.1} parent=75 // pred_fallthru
          _
      $region76: #{tpu_custom_call.1} parent=5 // pred_fallthru
        _
    $region6: #{tpu_custom_call.1} parent=1 // loop_footer
      %s28 = sadd.s32 1, %s24
    $region7: #{tpu_custom_call.1} parent=1 // loop_footer_branch
      %23 = sbr.rel target = $region3
    $region8: #{tpu_custom_call.1} parent=1 // loop_exit
      _
    %517 = vsyncpa [#allocation3], 1
    %s518 = scalar_lea.sflag [#allocation3], 1
    %519 = vsyncpa %s518, 1
    %520 = vsyncpa [#allocation6], 1
    %s521 = scalar_lea.sflag [#allocation6], 1
    %522 = vsyncpa %s521, 1
    %523 = vsyncpa [#allocation9], 1
    %s524 = scalar_lea.sflag [#allocation9], 1
    %525 = vsyncpa %s524, 1
    %526 = vsyncpa [#allocation4], 1
    %s527 = scalar_lea.sflag [#allocation4], 1
    %528 = vsyncpa %s527, 1

</llo_original>
